<compile_context>
chip_gen: v7x
topology: tpu7x:2x2x1
jax: 0.10.0
libtpu: 0.0.40
codegen_flags: <defaults>
</compile_context>

<pallas_src>
import jax
import jax.numpy as jnp
from jax.experimental import pallas as pl
from jax.experimental.pallas import tpu as pltpu


def _swiglu_split_kernel(x1_ref, x2_ref, o_ref):
    # x1/x2 arrive as separate lane-aligned tiles (no in-kernel lane slice).
    x1 = x1_ref[...].astype(jnp.float32)
    x2 = x2_ref[...].astype(jnp.float32)
    o_ref[...] = (x1 * (x2 * jax.nn.sigmoid(x2))).astype(o_ref.dtype)


def _swiglu_fused_kernel(x_ref, o_ref):
    # Small-H fallback: full-width (tr, 2H) tile, split in-kernel.
    x = x_ref[...].astype(jnp.float32)
    h = x.shape[-1] // 2
    x1 = x[:, :h]
    x2 = x[:, h:]
    o_ref[...] = (x1 * (x2 * jax.nn.sigmoid(x2))).astype(o_ref.dtype)


def _round_down(a, b):
    return (a // b) * b


def _vmem_budget_and_limit():
    """(tile budget bytes, vmem_limit_bytes) sized to the running chip."""
    cap = 64 << 20  # assume the most restrictive modern part (v7x: 64 MiB)
    try:
        cap = int(getattr(pltpu.get_tpu_info(), "vmem_capacity_bytes", cap))
    except Exception:  # query can fail off-device / under interpret mode
        pass
    if cap >= (100 << 20):          # v5e / v6e class: 128 MiB physical VMEM
        return 56 << 20, 96 << 20
    return 36 << 20, 56 << 20       # v7x class: 64 MiB physical VMEM


def _pick_row_tile(m, tc, dtype_bytes, sublane, budget):
    """Largest row tile whose double-buffered I/O (plus headroom for the f32
    elementwise temporaries) fits the VMEM budget."""
    if m <= sublane:
        return m  # block equals the full (tiny) row extent
    # Per-row VMEM working set: double-buffered x1/x2/out tiles plus headroom
    # for ~4 block-sized f32 temporaries produced by the elementwise chain.
    per_row = 2 * (3 * tc * dtype_bytes) + 4 * tc * 4
    tr = budget // max(per_row, 1)
    tr = _round_down(min(tr, m), sublane)
    return max(tr, sublane)


def swiglu(x: jnp.ndarray) -> jnp.ndarray:
    """SwiGLU over the last axis. x: (..., 2*H) -> (..., H)."""
    orig_shape = x.shape
    two_h = orig_shape[-1]
    assert two_h % 2 == 0, "last dim must be even"
    h = two_h // 2

    m = 1
    for d in orig_shape[:-1]:
        m *= d
    x2d = x.reshape(m, two_h)

    dtype_bytes = jnp.dtype(x.dtype).itemsize
    sublane = max(8, 32 // dtype_bytes)  # 8 (f32), 16 (bf16), 32 (int8)
    budget, vmem_limit = _vmem_budget_and_limit()
    tr = _pick_row_tile(m, h, dtype_bytes, sublane, budget)
    grid = (pl.cdiv(m, tr),)

    if h % 128 == 0:
        # Fast path: x1/x2 delivered as two separate lane-aligned (tr, H)
        # tiles by passing the same HBM array twice with block-column 0 / 1
        # index maps. Feature tile = full H, so per-step bytes depend only
        # on tr. The shared read of x2d is not duplicated HBM traffic: the
        # two BlockSpecs cover disjoint halves of each row.
        out2d = pl.pallas_call(
            _swiglu_split_kernel,
            out_shape=jax.ShapeDtypeStruct((m, h), x.dtype),
            grid_spec=pltpu.PrefetchScalarGridSpec(
                num_scalar_prefetch=0,
                grid=grid,
                in_specs=[
                    pl.BlockSpec((tr, h), lambda i: (i, 0)),   # x1 half
                    pl.BlockSpec((tr, h), lambda i: (i, 1)),   # x2 half
                ],
                out_specs=pl.BlockSpec((tr, h), lambda i: (i, 0)),
            ),
            compiler_params=pltpu.CompilerParams(
                dimension_semantics=("parallel",),
                vmem_limit_bytes=vmem_limit),
        )(x2d, x2d)
    else:
        # Small-H fallback (H not a multiple of 128): full-width tile, split
        # in-kernel. Block last dims equal the full array widths, so the
        # (8,128) BlockSpec constraint is satisfied for any H.
        # TODO(synk): for H < 128, fold rows into the lane axis wrapper-side
        # (and feed x1/x2 as separate lane-aligned tiles) so the output store
        # is lane-dense instead of masked vst.msk partial stores.
        out2d = pl.pallas_call(
            _swiglu_fused_kernel,
            out_shape=jax.ShapeDtypeStruct((m, h), x.dtype),
            grid_spec=pltpu.PrefetchScalarGridSpec(
                num_scalar_prefetch=0,
                grid=grid,
                in_specs=[pl.BlockSpec((tr, two_h), lambda i: (i, 0))],
                out_specs=pl.BlockSpec((tr, h), lambda i: (i, 0)),
            ),
            compiler_params=pltpu.CompilerParams(
                dimension_semantics=("parallel",),
                vmem_limit_bytes=vmem_limit),
        )(x2d)

    return out2d.reshape(*orig_shape[:-1], h)


if __name__ == "__main__":
    key = jax.random.PRNGKey(0)
    k1, k2, k3 = jax.random.split(key, 3)

    def ref_swiglu(v):
        v1, v2 = jnp.split(v, 2, axis=-1)
        return v1 * (v2 * jax.nn.sigmoid(v2))

    # 1) Small-H fallback path (H = 32 < 128), f32 — matches the module's
    #    small-shape usage (batch=2, seq=8, hidden=2*32).
    x_small = jax.random.normal(k1, (2, 8, 64), dtype=jnp.float32)
    out_small = jax.block_until_ready(swiglu(x_small))
    assert out_small.shape == (2, 8, 32)
    assert jnp.allclose(out_small, ref_swiglu(x_small), atol=1e-5, rtol=1e-5)

    # 2) Lane-aligned fast path (H = 128), f32.
    x_f32 = jax.random.normal(k2, (2, 8, 256), dtype=jnp.float32)
    out_f32 = jax.block_until_ready(swiglu(x_f32))
    assert out_f32.shape == (2, 8, 128)
    assert jnp.allclose(out_f32, ref_swiglu(x_f32), atol=1e-5, rtol=1e-5)

    # 3) Lane-aligned fast path, bf16 (compute upcast to f32 in-kernel).
    x_bf16 = jax.random.normal(k3, (2, 8, 256), dtype=jnp.bfloat16)
    out_bf16 = jax.block_until_ready(swiglu(x_bf16))
    ref_bf16 = ref_swiglu(x_bf16.astype(jnp.float32))
    assert out_bf16.shape == (2, 8, 128)
    assert jnp.allclose(out_bf16.astype(jnp.float32), ref_bf16, atol=2e-2, rtol=2e-2)

    print("KERNEL_OK")
</pallas_src>

<mosaic_0001>
module attributes {stable_mosaic.version = 11 : i64} {
  func.func @_swiglu_fused_kernel(%arg0: i32, %arg1: memref<16x64xf32, #tpu.memory_space<vmem>>, %arg2: memref<16x32xf32, #tpu.memory_space<vmem>>) attributes {dimension_semantics = [#tpu.dimension_semantics<parallel>], iteration_bounds = array<i64: 1>, scalar_prefetch = 0 : i64, scratch_operands = 0 : i64, tpu.core_type = #tpu.core_type<tc>, window_params = [{transform_indices = @transform_0, window_bounds = array<i64: 16, 64>}, {transform_indices = @transform_1, window_bounds = array<i64: 16, 32>}]} {
    %c0 = arith.constant 0 : index
    %c0_0 = arith.constant 0 : index
    %0 = vector.load %arg1[%c0, %c0_0] : memref<16x64xf32, #tpu.memory_space<vmem>>, vector<16x64xf32>
    %1 = vector.extract_strided_slice %0 {offsets = [0, 0], sizes = [16, 32], strides = [1, 1]} : vector<16x64xf32> to vector<16x32xf32>
    %2 = vector.extract_strided_slice %0 {offsets = [0, 32], sizes = [16, 32], strides = [1, 1]} : vector<16x64xf32> to vector<16x32xf32>
    %3 = arith.negf %2 : vector<16x32xf32>
    %4 = math.exp %3 : vector<16x32xf32>
    %cst = arith.constant 1.000000e+00 : f32
    %5 = vector.broadcast %cst : f32 to vector<16x32xf32>
    %6 = arith.addf %5, %4 : vector<16x32xf32>
    %7 = arith.divf %5, %6 : vector<16x32xf32>
    %8 = arith.mulf %2, %7 : vector<16x32xf32>
    %9 = arith.mulf %1, %8 : vector<16x32xf32>
    %c0_1 = arith.constant 0 : index
    %c0_2 = arith.constant 0 : index
    %10 = vector.load %arg2[%c0_1, %c0_2] : memref<16x32xf32, #tpu.memory_space<vmem>>, vector<16x32xf32>
    tpu.vector_store %arg2[%c0_1, %c0_2], %9 {strides = array<i32>} : memref<16x32xf32, #tpu.memory_space<vmem>>, vector<16x32xf32>,
    return
  }
  func.func @transform_0(%arg0: i32) -> (i32, i32) {
    %c0_i32 = arith.constant 0 : i32
    %c0_i32_0 = arith.constant 0 : i32
    return %arg0, %c0_i32 : i32, i32
  }
  func.func @transform_1(%arg0: i32) -> (i32, i32) {
    %c0_i32 = arith.constant 0 : i32
    %c0_i32_0 = arith.constant 0 : i32
    return %arg0, %c0_i32 : i32, i32
  }
}

</mosaic_0001>

<llo_original>
// kernel: tpu_custom_call.1
$region0: #{tpu_custom_call.1}
  #allocation0 [shape = 'u32[]', space=smem, size = 0x4, offset = 0x4, fixed_abs, tag = 'smem constant byte address 0x4 - core index']
  #allocation1 [shape = 'u32[144,128]{1,0:T(1,128)}', space=vmem, size = 0x12000, scoped, tag = 'internal scratch']
  %s0 = inlined_call_operand.hbm [shape: f32[16,64], index: 0, kind: input, shape index: {}]
  %s1 = inlined_call_operand.hbm [shape: f32[16,32], index: 1, kind: output, shape index: {}]
  %s2 = sld [smem:[#allocation0]]
  $region18: #{tpu_custom_call.1} parent=0
    _
  %s4 = ssub.s32 1, %s2
  %s5 = scalar_select 0, %s4, %s2
  $region1: #{tpu_custom_call.1} parent=0
    #allocation2 [shape = 'u8[8192]{0}', space=vmem, size = 0x2000, scoped, tag = 'input window, operand 0, single buffered']
    #allocation3 [shape = 's32[1]{0}', space=sflag, size = 0x4, scoped, tag = 'scoped memory for tpu_custom_call.1']
    #allocation4 [shape = 's32[1]{0}', space=sflag, size = 0x4, scoped, tag = 'scoped memory for tpu_custom_call.1']
    #allocation5 [shape = 'u8[8192]{0}', space=vmem, size = 0x2000, scoped, tag = 'output window, operand 0, single buffered']
    %6 = vsyncpa [#allocation3], 0
    %7 = vsyncpa [#allocation4], 0
    // Predicated region
    $region2: #{tpu_custom_call.1} parent=1 // pred_check
      _
    $region3: #{tpu_custom_call.1} parent=1 // pred_check_branch
      %9 = sbr.rel (0) target = $region5
    $region4: #{tpu_custom_call.1} parent=1 // pred_region
      %s11 = ssub.s32 256, 256
      %12 = vsyncadd [#allocation3], %s11
      %s13 = sshll.u32 [#allocation2], 4
      %s14 = int_to_ptr.vmem [resolvable:$true] %s13
      %19 = dma.hbm_to_vmem [thread:$0]  %s0, 256, %s14, [#allocation3], 128, 128, 8
    $region5: #{tpu_custom_call.1} parent=1 // pred_fallthru
      _
    // Predicated region
    $region6: #{tpu_custom_call.1} parent=1 // pred_check
      _
    $region7: #{tpu_custom_call.1} parent=1 // pred_check_branch
      %21 = sbr.rel (0) target = $region9
    $region8: #{tpu_custom_call.1} parent=1 // pred_region
      %22 = dma.done [#allocation3], 256
    $region9: #{tpu_custom_call.1} parent=1 // pred_fallthru
      _
    %v23 = vld [vmem:[#allocation2] sm:$0xff]
    %v24 = vld [vmem:[#allocation2 + $0x8] sm:$0xff]
    %v25 = vxor.u32 %v23, 2147483648
    %v26 = vxor.u32 %v24, 2147483648
    %v27 = vmul.f32 %v25, 1.442695
    %v28 = vpow.pop %v27
    %v29 = vmul.f32 %v26, 1.442695
    %v30 = vpow.pop %v29
    %v31 = vadd.f32 %v28, 1.0
    %v32 = vadd.f32 %v30, 1.0
    %v33 = vrcp.pop %v31
    %v34 = vmul.f32 1.0, %v33
    %v35 = vrcp.pop %v32
    %v36 = vmul.f32 1.0, %v35
    %v37 = vmul.f32 %v23, %v34
    %v38 = vmul.f32 %v24, %v36
    %41 = vrot.lane.b32.xlu0 %v37, 96
    %v42 = vpop.permute.xlu0 %41
    %43 = vrot.lane.b32.xlu0 %v38, 96
    %v44 = vpop.permute.xlu0 %43
    %v47 = vmul.f32 %v23, %v42
    %v48 = vmul.f32 %v24, %v44
    %vm49 = vcmask 261120
    %50 = vst.msk [vmem:[#allocation5] sm:$0xff] %vm49, %v47
    %51 = vst.msk [vmem:[#allocation5 + $0x8] sm:$0xff] %vm49, %v48
    // Predicated region
    $region10: #{tpu_custom_call.1} parent=1 // pred_check
      _
    $region11: #{tpu_custom_call.1} parent=1 // pred_check_branch
      %53 = sbr.rel (0) target = $region13
    $region12: #{tpu_custom_call.1} parent=1 // pred_region
      %s55 = ssub.s32 256, 256
      %56 = vsyncadd [#allocation4], %s55
      %s57 = sshll.u32 [#allocation5], 4
      %s58 = int_to_ptr.vmem [resolvable:$true] %s57
      %63 = dma.vmem_to_hbm [thread:$0]  %s58, 256, %s1, [#allocation4], 128, 128, 8
    $region13: #{tpu_custom_call.1} parent=1 // pred_fallthru
      _
    // Predicated region
    $region14: #{tpu_custom_call.1} parent=1 // pred_check
      _
    $region15: #{tpu_custom_call.1} parent=1 // pred_check_branch
      %65 = sbr.rel (0) target = $region17
    $region16: #{tpu_custom_call.1} parent=1 // pred_region
      %66 = dma.done [#allocation4], 256
    $region17: #{tpu_custom_call.1} parent=1 // pred_fallthru
      _
    %67 = vsyncpa [#allocation3], 1
    %68 = vsyncpa [#allocation4], 1

</llo_original>
